<compile_context>
chip_gen: v7x
topology: tpu7x:2x2x1
jax: 0.10.0
libtpu: 0.0.40
codegen_flags: <defaults>
</compile_context>

<pallas_src>
import functools

import jax
import jax.numpy as jnp
from jax.experimental import pallas as pl
from jax.experimental.pallas import tpu as pltpu


def _gcn_kernel(adj_ref, dinv_ref, batch_ref,
                x_ref, w1_ref, b1_ref, w2_ref, b2_ref, out_ref):
    n = adj_ref.shape[0]
    g = out_ref.shape[0]

    adj = adj_ref[...]                       # (N, N) bf16, fed to the MXU as-is
    d = dinv_ref[...]                        # (N, 1) f32 = D^{-1/2}

    # GCNConv 1:  d * ((A+I) @ (d * (X @ W1))) + b1 -> ReLU
    xw1 = jnp.dot(x_ref[...], w1_ref[...], preferred_element_type=jnp.float32)
    xw1 = (xw1 * d).astype(jnp.bfloat16)
    h1 = d * jnp.dot(adj, xw1, preferred_element_type=jnp.float32) + b1_ref[...]
    h1 = jnp.maximum(h1, 0.0)

    # GCNConv 2:  d * ((A+I) @ (d * (H1 @ W2))) + b2
    xw2 = jnp.dot(h1.astype(jnp.bfloat16), w2_ref[...],
                  preferred_element_type=jnp.float32)
    xw2 = (xw2 * d).astype(jnp.bfloat16)
    h2 = d * jnp.dot(adj, xw2, preferred_element_type=jnp.float32) + b2_ref[...]

    # global_mean_pool: (G, N) membership one-hot built in-kernel from the batch
    # vector; rows pre-scaled by 1/count (EUP reciprocal) so pooled = onehot @ h2
    # directly gives the mean.  bf16 MXU matmul with f32 accumulation.
    graph_ids = jax.lax.broadcasted_iota(jnp.int32, (g, n), 0)
    onehot = (batch_ref[...] == graph_ids).astype(jnp.float32)        # (G, N)
    counts = jnp.sum(onehot, axis=1, keepdims=True)                    # (G, 1)
    inv_counts = pl.reciprocal(jnp.maximum(counts, 1.0), approx=True)
    onehot_w = (onehot * inv_counts).astype(jnp.bfloat16)
    pooled = jnp.dot(onehot_w, h2.astype(jnp.bfloat16),
                     preferred_element_type=jnp.float32)               # (G, C)

    # log_softmax over dim=1.
    m = jnp.max(pooled, axis=1, keepdims=True)
    lse = jnp.log(jnp.sum(jnp.exp(pooled - m), axis=1, keepdims=True)) + m
    out_ref[...] = pooled - lse


def init_params(key, num_node_features, hidden=16, num_classes=2):
    """Glorot-uniform init matching GCNConv(in, out) weight/bias shapes."""
    k1, k2 = jax.random.split(key)

    def glorot(k, fan_in, fan_out):
        limit = jnp.sqrt(6.0 / (fan_in + fan_out))
        return jax.random.uniform(k, (fan_in, fan_out), jnp.float32, -limit, limit)

    w1 = glorot(k1, num_node_features, hidden)
    b1 = jnp.zeros((hidden,), jnp.float32)
    w2 = glorot(k2, hidden, num_classes)
    b2 = jnp.zeros((num_classes,), jnp.float32)
    return (w1, b1, w2, b2)


@functools.partial(jax.jit, static_argnames=("num_graphs",))
def gcn_forward(x, edge_index, batch, params, *, num_graphs):
    """x: (N, F) f32, edge_index: (2, E) i32 (src; dst), batch: (N,) i32."""
    N = x.shape[0]
    w1, b1, w2, b2 = params
    num_classes = w2.shape[1]

    # --- glue: dense (A + I) built by appending self-loop edges and
    # scatter-adding DIRECTLY into bf16 (no eye / f32 N^2 intermediate / cast
    # pass).  Scatter has no clean Pallas equivalent, so it stays in the
    # wrapper.  bf16 stores edge multiplicities exactly up to 256.
    # NOTE: deg comes from dst only (in-degree + self-loop); matches PyG's
    # gcn_norm when both edge directions are present, as in this test.
    loops = jnp.arange(N, dtype=edge_index.dtype)
    src = jnp.concatenate([edge_index[0], loops])
    dst = jnp.concatenate([edge_index[1], loops])
    adj = jnp.zeros((N, N), jnp.bfloat16).at[dst, src].add(jnp.bfloat16(1.0))
    deg = jnp.zeros((N,), jnp.float32).at[dst].add(1.0)    # row sums of (A + I)
    d_inv_sqrt = jax.lax.rsqrt(deg)

    vmem = pl.BlockSpec(memory_space=pltpu.MemorySpace.VMEM)
    return pl.pallas_call(
        _gcn_kernel,
        out_shape=jax.ShapeDtypeStruct((num_graphs, num_classes), jnp.float32),
        in_specs=[vmem] * 8,
        out_specs=vmem,
    )(
        adj,                                      # (N, N) bf16: single N^2 operand
        d_inv_sqrt.reshape(N, 1),                 # (N, 1) f32 D^{-1/2}
        batch.reshape(1, N).astype(jnp.int32),    # (1, N) graph assignment
        x.astype(jnp.bfloat16),
        w1.astype(jnp.bfloat16), b1.reshape(1, -1),
        w2.astype(jnp.bfloat16), b2.reshape(1, -1),
    )


def gcn_reference(x, edge_index, batch, params, num_graphs):
    """Pure-JAX f32 reference (PyG GCNConv semantics) for validation."""
    N = x.shape[0]
    src, dst = edge_index[0], edge_index[1]
    adj = jnp.zeros((N, N), jnp.float32).at[dst, src].add(1.0) \
        + jnp.eye(N, dtype=jnp.float32)
    deg = jnp.sum(adj, axis=1)
    dis = 1.0 / jnp.sqrt(deg)
    a_hat = dis[:, None] * adj * dis[None, :]
    w1, b1, w2, b2 = params
    h1 = jnp.maximum(a_hat @ (x @ w1) + b1, 0.0)
    h2 = a_hat @ (h1 @ w2) + b2
    onehot = (batch[None, :] == jnp.arange(num_graphs)[:, None]).astype(jnp.float32)
    pooled = (onehot @ h2) / jnp.maximum(onehot.sum(axis=1, keepdims=True), 1.0)
    return jax.nn.log_softmax(pooled, axis=1)


if __name__ == "__main__":
    key = jax.random.PRNGKey(0)
    k_x, k_p = jax.random.split(key)

    num_node_features = 4
    nodes_per_graph = 8
    num_graphs = 2
    N = nodes_per_graph * num_graphs

    # node features
    x = jax.random.normal(k_x, (N, num_node_features), jnp.float32)

    # deterministic ring edges (both directions) within each graph
    src_list, dst_list = [], []
    for g in range(num_graphs):
        base = g * nodes_per_graph
        for i in range(nodes_per_graph):
            a = base + i
            b = base + (i + 1) % nodes_per_graph
            src_list += [a, b]
            dst_list += [b, a]
    edge_index = jnp.array([src_list, dst_list], dtype=jnp.int32)   # (2, 32)

    # batch assignment vector
    batch = jnp.repeat(jnp.arange(num_graphs, dtype=jnp.int32), nodes_per_graph)

    params = init_params(k_p, num_node_features)

    out = gcn_forward(x, edge_index, batch, params, num_graphs=num_graphs)
    out = jax.block_until_ready(out)
    assert out.shape == (num_graphs, 2)

    # validate bf16-MXU kernel against f32 reference
    ref = gcn_reference(x, edge_index, batch, params, num_graphs)
    max_err = float(jnp.max(jnp.abs(out - ref)))
    assert max_err < 5e-2, f"kernel deviates from f32 reference: {max_err}"

    print("KERNEL_OK")
</pallas_src>

<mosaic_0001>
module attributes {stable_mosaic.version = 11 : i64} {
  func.func private @main(%arg0: i32) attributes {dimension_semantics = [#tpu.dimension_semantics<core_parallel>], iteration_bounds = array<i64: 2>, tpu.core_type = #tpu.core_type<sc_scalar_subcore>, window_params = []} {
    return
  }
}

module attributes {stable_mosaic.version = 11 : i64} {
  func.func private @main(%arg0: i32) attributes {dimension_semantics = [#tpu.dimension_semantics<core_parallel>], iteration_bounds = array<i64: 2>, tpu.core_type = #tpu.core_type<sc_scalar_subcore>, window_params = []} {
    return
  }
}

module attributes {stable_mosaic.version = 11 : i64} {
  func.func @_gcn_kernel(%arg0: memref<16x16xbf16, #tpu.memory_space<vmem>>, %arg1: memref<16x1xf32, #tpu.memory_space<vmem>>, %arg2: memref<1x16xi32, #tpu.memory_space<vmem>>, %arg3: memref<16x4xbf16, #tpu.memory_space<vmem>>, %arg4: memref<4x16xbf16, #tpu.memory_space<vmem>>, %arg5: memref<1x16xf32, #tpu.memory_space<vmem>>, %arg6: memref<16x2xbf16, #tpu.memory_space<vmem>>, %arg7: memref<1x2xf32, #tpu.memory_space<vmem>>, %arg8: memref<2x2xf32, #tpu.memory_space<vmem>>) attributes {dimension_semantics = [], scalar_prefetch = 0 : i64, scratch_operands = 0 : i64, tpu.core_type = #tpu.core_type<tc>} {
    %c0 = arith.constant 0 : index
    %c0_0 = arith.constant 0 : index
    %0 = vector.load %arg0[%c0, %c0_0] : memref<16x16xbf16, #tpu.memory_space<vmem>>, vector<16x16xbf16>
    %c0_1 = arith.constant 0 : index
    %c0_2 = arith.constant 0 : index
    %1 = vector.load %arg1[%c0_1, %c0_2] : memref<16x1xf32, #tpu.memory_space<vmem>>, vector<16x1xf32>
    %c0_3 = arith.constant 0 : index
    %c0_4 = arith.constant 0 : index
    %2 = vector.load %arg3[%c0_3, %c0_4] : memref<16x4xbf16, #tpu.memory_space<vmem>>, vector<16x4xbf16>
    %c0_5 = arith.constant 0 : index
    %c0_6 = arith.constant 0 : index
    %3 = vector.load %arg4[%c0_5, %c0_6] : memref<4x16xbf16, #tpu.memory_space<vmem>>, vector<4x16xbf16>
    %cst = arith.constant dense<0.000000e+00> : vector<16x16xf32>
    %4 = tpu.matmul %2, %3, %cst {dimension_numbers = #tpu.dot_dimension_numbers<[1], [0], [0], [1], [0, 0, 1, 1], [], []>} : vector<16x4xbf16>, vector<4x16xbf16>, vector<16x16xf32> -> vector<16x16xf32>
    %5 = vector.broadcast %1 : vector<16x1xf32> to vector<16x16xf32>
    %6 = arith.mulf %4, %5 : vector<16x16xf32>
    %7 = arith.truncf %6 : vector<16x16xf32> to vector<16x16xbf16>
    %cst_7 = arith.constant dense<0.000000e+00> : vector<16x16xf32>
    %8 = tpu.matmul %0, %7, %cst_7 {dimension_numbers = #tpu.dot_dimension_numbers<[1], [0], [0], [1], [0, 0, 1, 1], [], []>} : vector<16x16xbf16>, vector<16x16xbf16>, vector<16x16xf32> -> vector<16x16xf32>
    %9 = vector.broadcast %1 : vector<16x1xf32> to vector<16x16xf32>
    %10 = arith.mulf %9, %8 : vector<16x16xf32>
    %c0_8 = arith.constant 0 : index
    %c0_9 = arith.constant 0 : index
    %11 = vector.load %arg5[%c0_8, %c0_9] : memref<1x16xf32, #tpu.memory_space<vmem>>, vector<1x16xf32>
    %12 = vector.broadcast %11 : vector<1x16xf32> to vector<16x16xf32>
    %13 = arith.addf %10, %12 : vector<16x16xf32>
    %cst_10 = arith.constant 0.000000e+00 : f32
    %14 = vector.broadcast %cst_10 : f32 to vector<16x16xf32>
    %15 = arith.maximumf %13, %14 : vector<16x16xf32>
    %16 = arith.truncf %15 : vector<16x16xf32> to vector<16x16xbf16>
    %c0_11 = arith.constant 0 : index
    %c0_12 = arith.constant 0 : index
    %17 = vector.load %arg6[%c0_11, %c0_12] : memref<16x2xbf16, #tpu.memory_space<vmem>>, vector<16x2xbf16>
    %cst_13 = arith.constant dense<0.000000e+00> : vector<16x2xf32>
    %18 = tpu.matmul %16, %17, %cst_13 {dimension_numbers = #tpu.dot_dimension_numbers<[1], [0], [0], [1], [0, 0, 1, 1], [], []>} : vector<16x16xbf16>, vector<16x2xbf16>, vector<16x2xf32> -> vector<16x2xf32>
    %19 = vector.broadcast %1 : vector<16x1xf32> to vector<16x2xf32>
    %20 = arith.mulf %18, %19 : vector<16x2xf32>
    %21 = arith.truncf %20 : vector<16x2xf32> to vector<16x2xbf16>
    %cst_14 = arith.constant dense<0.000000e+00> : vector<16x2xf32>
    %22 = tpu.matmul %0, %21, %cst_14 {dimension_numbers = #tpu.dot_dimension_numbers<[1], [0], [0], [1], [0, 0, 1, 1], [], []>} : vector<16x16xbf16>, vector<16x2xbf16>, vector<16x2xf32> -> vector<16x2xf32>
    %23 = vector.broadcast %1 : vector<16x1xf32> to vector<16x2xf32>
    %24 = arith.mulf %23, %22 : vector<16x2xf32>
    %c0_15 = arith.constant 0 : index
    %c0_16 = arith.constant 0 : index
    %25 = vector.load %arg7[%c0_15, %c0_16] : memref<1x2xf32, #tpu.memory_space<vmem>>, vector<1x2xf32>
    %26 = vector.broadcast %25 : vector<1x2xf32> to vector<16x2xf32>
    %27 = arith.addf %24, %26 : vector<16x2xf32>
    %28 = tpu.iota {dimensions = array<i32: 0>} : vector<2x16xi32>
    %c0_17 = arith.constant 0 : index
    %c0_18 = arith.constant 0 : index
    %29 = vector.load %arg2[%c0_17, %c0_18] : memref<1x16xi32, #tpu.memory_space<vmem>>, vector<1x16xi32>
    %30 = vector.broadcast %29 : vector<1x16xi32> to vector<2x16xi32>
    %31 = arith.cmpi eq, %30, %28 : vector<2x16xi32>
    %32 = arith.extui %31 : vector<2x16xi1> to vector<2x16xi32>
    %33 = arith.sitofp %32 : vector<2x16xi32> to vector<2x16xf32>
    %cst_19 = arith.constant dense<0.000000e+00> : vector<2xf32>
    %34 = vector.multi_reduction <add>, %33, %cst_19 [1] : vector<2x16xf32> to vector<2xf32>
    %35 = vector.shape_cast %34 : vector<2xf32> to vector<2x1xf32>
    %cst_20 = arith.constant 1.000000e+00 : f32
    %36 = vector.broadcast %cst_20 : f32 to vector<2x1xf32>
    %37 = arith.maximumf %35, %36 : vector<2x1xf32>
    %38 = tpu.reciprocal %37 {approx = true} : vector<2x1xf32> -> vector<2x1xf32>
    %39 = vector.broadcast %38 : vector<2x1xf32> to vector<2x16xf32>
    %40 = arith.mulf %33, %39 : vector<2x16xf32>
    %41 = arith.truncf %40 : vector<2x16xf32> to vector<2x16xbf16>
    %42 = arith.truncf %27 : vector<16x2xf32> to vector<16x2xbf16>
    %cst_21 = arith.constant dense<0.000000e+00> : vector<2x2xf32>
    %43 = tpu.matmul %41, %42, %cst_21 {dimension_numbers = #tpu.dot_dimension_numbers<[1], [0], [0], [1], [0, 0, 1, 1], [], []>} : vector<2x16xbf16>, vector<16x2xbf16>, vector<2x2xf32> -> vector<2x2xf32>
    %cst_22 = arith.constant dense<0xFF800000> : vector<2xf32>
    %44 = vector.multi_reduction <maximumf>, %43, %cst_22 [1] : vector<2x2xf32> to vector<2xf32>
    %45 = vector.shape_cast %44 : vector<2xf32> to vector<2x1xf32>
    %46 = vector.broadcast %45 : vector<2x1xf32> to vector<2x2xf32>
    %47 = arith.subf %43, %46 : vector<2x2xf32>
    %48 = math.exp %47 : vector<2x2xf32>
    %cst_23 = arith.constant dense<0.000000e+00> : vector<2xf32>
    %49 = vector.multi_reduction <add>, %48, %cst_23 [1] : vector<2x2xf32> to vector<2xf32>
    %50 = vector.shape_cast %49 : vector<2xf32> to vector<2x1xf32>
    %51 = math.log %50 : vector<2x1xf32>
    %52 = arith.addf %51, %45 : vector<2x1xf32>
    %53 = vector.broadcast %52 : vector<2x1xf32> to vector<2x2xf32>
    %54 = arith.subf %43, %53 : vector<2x2xf32>
    %c0_24 = arith.constant 0 : index
    %c0_25 = arith.constant 0 : index
    %55 = vector.load %arg8[%c0_24, %c0_25] : memref<2x2xf32, #tpu.memory_space<vmem>>, vector<2x2xf32>
    tpu.vector_store %arg8[%c0_24, %c0_25], %54 {strides = array<i32>} : memref<2x2xf32, #tpu.memory_space<vmem>>, vector<2x2xf32>,
    return
  }
}

</mosaic_0001>

<llo_original>
// kernel: gcn_forward.1
$region0: #{gcn_forward.1}
  #allocation0 [shape = 'u32[]', space=smem, size = 0x4, offset = 0x4, fixed_abs, tag = 'smem constant byte address 0x4 - core index']
  #allocation1 [shape = 'u32[144,128]{1,0:T(1,128)}', space=vmem, size = 0x12000, scoped, tag = 'internal scratch']
  %s0 = inlined_call_operand.vmem [shape: bf16[16,16], index: 0, kind: input, shape index: {}]
  %s1 = inlined_call_operand.vmem [shape: f32[16,1], index: 1, kind: input, shape index: {}]
  %s2 = inlined_call_operand.vmem [shape: s32[1,16], index: 2, kind: input, shape index: {}]
  %s3 = inlined_call_operand.vmem [shape: bf16[16,4], index: 3, kind: input, shape index: {}]
  %s4 = inlined_call_operand.vmem [shape: bf16[4,16], index: 4, kind: input, shape index: {}]
  %s5 = inlined_call_operand.vmem [shape: f32[1,16], index: 5, kind: input, shape index: {}]
  %s6 = inlined_call_operand.vmem [shape: bf16[16,2], index: 6, kind: input, shape index: {}]
  %s7 = inlined_call_operand.vmem [shape: f32[1,2], index: 7, kind: input, shape index: {}]
  %s8 = inlined_call_operand.hbm [shape: f32[2,2], index: 8, kind: output, shape index: {}]
  %s9 = sld [smem:[#allocation0]]
  $region42: #{gcn_forward.1} parent=0
    _
  %s11 = ssub.s32 1, %s9
  %s12 = scalar_select 0, %s11, %s9
  $region1: #{gcn_forward.1} parent=0
    #allocation2 [shape = 'u8[1024]{0}', space=vmem, size = 0x400, scoped, tag = 'output window, operand 0, single buffered']
    #allocation3 [shape = 's32[1]{0}', space=sflag, size = 0x4, scoped, tag = 'scoped memory for gcn_forward.1']
    %13 = vsyncpa [#allocation3], 0
    // Predicated region
    $region2: #{gcn_forward.1} parent=1 // pred_check
      _
    $region3: #{gcn_forward.1} parent=1 // pred_check_branch
      %15 = sbr.rel (0) target = $region5
    $region4: #{gcn_forward.1} parent=1 // pred_region
      _
    $region5: #{gcn_forward.1} parent=1 // pred_fallthru
      _
    // Predicated region
    $region6: #{gcn_forward.1} parent=1 // pred_check
      _
    $region7: #{gcn_forward.1} parent=1 // pred_check_branch
      %17 = sbr.rel (0) target = $region9
    $region8: #{gcn_forward.1} parent=1 // pred_region
      _
    $region9: #{gcn_forward.1} parent=1 // pred_fallthru
      _
    // Predicated region
    $region10: #{gcn_forward.1} parent=1 // pred_check
      _
    $region11: #{gcn_forward.1} parent=1 // pred_check_branch
      %19 = sbr.rel (0) target = $region13
    $region12: #{gcn_forward.1} parent=1 // pred_region
      _
    $region13: #{gcn_forward.1} parent=1 // pred_fallthru
      _
    // Predicated region
    $region14: #{gcn_forward.1} parent=1 // pred_check
      _
    $region15: #{gcn_forward.1} parent=1 // pred_check_branch
      %21 = sbr.rel (0) target = $region17
    $region16: #{gcn_forward.1} parent=1 // pred_region
      _
    $region17: #{gcn_forward.1} parent=1 // pred_fallthru
      _
    // Predicated region
    $region18: #{gcn_forward.1} parent=1 // pred_check
      _
    $region19: #{gcn_forward.1} parent=1 // pred_check_branch
      %23 = sbr.rel (0) target = $region21
    $region20: #{gcn_forward.1} parent=1 // pred_region
      _
    $region21: #{gcn_forward.1} parent=1 // pred_fallthru
      _
    // Predicated region
    $region22: #{gcn_forward.1} parent=1 // pred_check
      _
    $region23: #{gcn_forward.1} parent=1 // pred_check_branch
      %25 = sbr.rel (0) target = $region25
    $region24: #{gcn_forward.1} parent=1 // pred_region
      _
    $region25: #{gcn_forward.1} parent=1 // pred_fallthru
      _
    // Predicated region
    $region26: #{gcn_forward.1} parent=1 // pred_check
      _
    $region27: #{gcn_forward.1} parent=1 // pred_check_branch
      %27 = sbr.rel (0) target = $region29
    $region28: #{gcn_forward.1} parent=1 // pred_region
      _
    $region29: #{gcn_forward.1} parent=1 // pred_fallthru
      _
    // Predicated region
    $region30: #{gcn_forward.1} parent=1 // pred_check
      _
    $region31: #{gcn_forward.1} parent=1 // pred_check_branch
      %29 = sbr.rel (0) target = $region33
    $region32: #{gcn_forward.1} parent=1 // pred_region
      _
    $region33: #{gcn_forward.1} parent=1 // pred_fallthru
      _
    %v31 = vld [vmem:[%s0] sm:$0xf]
    %v32 = vld [vmem:[%s0 + $0x4] sm:$0xf]
    %v33 = vld [vmem:[%s1] sm:$0xff]
    %v34 = vld [vmem:[%s1 + $0x8] sm:$0xff]
    %v35 = vld [vmem:[%s3] sm:$0xf]
    %v36 = vld [vmem:[%s3 + $0x4] sm:$0xf]
    %v37 = vld [vmem:[%s4] sm:$0x3]
    %v40 = vunpack.c.l.b16 %v35
    %v41 = vunpack.c.l.b16 %v36
    %v42 = vpack.c.b16 %v41, %v40
    %vm43 = vcmask 31744
    %v45 = vsel %vm43, %v42, 0
    %vm47 = vcmask 1041408
    %v49 = vsel %vm47, %v37, 0
    %51 = vmatprep.subr.bf16.mxu0 0
    %52 = vmatpush1.bf16.msra.mxu0 %v49
    %53 = vmatprep.subr.bf16.mxu0 0
    %54 = vmatpush1.bf16.msra.mxu0 0
    %55 = vmatprep.subr.bf16.mxu0 0
    %56 = vmatpush1.bf16.msra.mxu0 0
    %57 = vmatprep.subr.bf16.mxu0 0
    %58 = vmatpush1.bf16.msra.mxu0 0
    %59 = vmatprep.subr.bf16.mxu0 0
    %60 = vmatpush1.bf16.msra.mxu0 0
    %61 = vmatprep.subr.bf16.mxu0 0
    %62 = vmatpush1.bf16.msra.mxu0 0
    %63 = vmatprep.subr.bf16.mxu0 0
    %64 = vmatpush1.bf16.msra.mxu0 0
    %65 = vmatprep.subr.bf16.mxu0 0
    %66 = vmatpush1.bf16.msra.mxu0 0
    %67 = vmatprep.subr.bf16.mxu0 0
    %68 = vmatpush1.bf16.msra.mxu0 0
    %69 = vmatprep.subr.bf16.mxu0 0
    %70 = vmatpush1.bf16.msra.mxu0 0
    %71 = vmatprep.subr.bf16.mxu0 0
    %72 = vmatpush1.bf16.msra.mxu0 0
    %73 = vmatprep.subr.bf16.mxu0 0
    %74 = vmatpush1.bf16.msra.mxu0 0
    %75 = vmatprep.subr.bf16.mxu0 0
    %76 = vmatpush1.bf16.msra.mxu0 0
    %77 = vmatprep.subr.bf16.mxu0 0
    %78 = vmatpush1.bf16.msra.mxu0 0
    %79 = vmatprep.subr.bf16.mxu0 0
    %80 = vmatpush1.bf16.msra.mxu0 0
    %81 = vmatprep.subr.bf16.mxu0 0
    %82 = vmatpush1.bf16.msra.mxu0 0
    %83 = vmatprep.mubr.bf16.mxu0 0
    %84 = vmatmul.mubr.bf16.gmra.mrb[0].mxu0 %v45
    %v85 = vpop.f32.mrb[0].mxu0
    %v86 = vadd.f32 0.0, %v85
    %v87 = vpop.f32.mrb[0].mxu0
    %v88 = vpop.f32.mrb[0].mxu0
    %v89 = vadd.f32 0.0, %v88
    %v90 = vpop.f32.mrb[0].mxu0
    %91 = vdwg.mxu0
    %93 = vset.pattern.permute.xlu0 0
    %94 = vperm.xlu0 %93, %v33
    %v95 = vpop.permute.xlu0 %94
    %98 = vset.pattern.permute.xlu0 0
    %99 = vperm.xlu0 %98, %v34
    %v100 = vpop.permute.xlu0 %99
    %v102 = vmul.f32 %v86, %v95
    %v103 = vmul.f32 %v89, %v100
    %v104 = vpack.c.bf16 %v103, %v102
    %v107 = vunpack.c.l.b16 %v31
    %v108 = vunpack.c.l.b16 %v32
    %v109 = vpack.c.b16 %v108, %v107
    %vm110 = vcmask 130048
    %v112 = vsel %vm110, %v109, 0
    %114 = vmatprep.subr.bf16.mxu0 0
    %115 = vmatpush1.bf16.msra.mxu0 %v104
    %116 = vmatprep.subr.bf16.mxu0 0
    %117 = vmatpush1.bf16.msra.mxu0 0
    %118 = vmatprep.subr.bf16.mxu0 0
    %119 = vmatpush1.bf16.msra.mxu0 0
    %120 = vmatprep.subr.bf16.mxu0 0
    %121 = vmatpush1.bf16.msra.mxu0 0
    %122 = vmatprep.subr.bf16.mxu0 0
    %123 = vmatpush1.bf16.msra.mxu0 0
    %124 = vmatprep.subr.bf16.mxu0 0
    %125 = vmatpush1.bf16.msra.mxu0 0
    %126 = vmatprep.subr.bf16.mxu0 0
    %127 = vmatpush1.bf16.msra.mxu0 0
    %128 = vmatprep.subr.bf16.mxu0 0
    %129 = vmatpush1.bf16.msra.mxu0 0
    %130 = vmatprep.subr.bf16.mxu0 0
    %131 = vmatpush1.bf16.msra.mxu0 0
    %132 = vmatprep.subr.bf16.mxu0 0
    %133 = vmatpush1.bf16.msra.mxu0 0
    %134 = vmatprep.subr.bf16.mxu0 0
    %135 = vmatpush1.bf16.msra.mxu0 0
    %136 = vmatprep.subr.bf16.mxu0 0
    %137 = vmatpush1.bf16.msra.mxu0 0
    %138 = vmatprep.subr.bf16.mxu0 0
    %139 = vmatpush1.bf16.msra.mxu0 0
    %140 = vmatprep.subr.bf16.mxu0 0
    %141 = vmatpush1.bf16.msra.mxu0 0
    %142 = vmatprep.subr.bf16.mxu0 0
    %143 = vmatpush1.bf16.msra.mxu0 0
    %144 = vmatprep.subr.bf16.mxu0 0
    %145 = vmatpush1.bf16.msra.mxu0 0
    %146 = vmatprep.mubr.bf16.mxu0 0
    %147 = vmatmul.mubr.bf16.gmra.mrb[0].mxu0 %v112
    %v148 = vpop.f32.mrb[0].mxu0
    %v149 = vadd.f32 0.0, %v148
    %v150 = vpop.f32.mrb[0].mxu0
    %v151 = vpop.f32.mrb[0].mxu0
    %v152 = vadd.f32 0.0, %v151
    %v153 = vpop.f32.mrb[0].mxu0
    %154 = vdwg.mxu0
    %v155 = vmul.f32 %v95, %v149
    %v156 = vmul.f32 %v100, %v152
    %v157 = vld [vmem:[%s5] sm:$0x1]
    %v159 = vlaneseq
    %v160 = vshrl.u32 %v159, 7
    %v161 = vsub.s32 0, %v160
    %v162 = vrot.slane %v157, %v161
    %v164 = vadd.f32 %v155, %v162
    %v165 = vadd.f32 %v156, %v162
    %v166 = vmax.f32 %v164, 0.0
    %v167 = vmax.f32 %v165, 0.0
    %v168 = vpack.c.bf16 %v167, %v166
    %v169 = vld [vmem:[%s6] sm:$0xf]
    %v170 = vld [vmem:[%s6 + $0x4] sm:$0xf]
    %v173 = vunpack.c.l.b16 %v169
    %v174 = vunpack.c.l.b16 %v170
    %v175 = vpack.c.b16 %v174, %v173
    %v178 = vsel %vm110, %v168, 0
    %180 = vmatprep.subr.bf16.mxu0 0
    %181 = vmatpush1.bf16.msra.mxu0 %v175
    %182 = vmatprep.subr.bf16.mxu0 0
    %183 = vmatpush1.bf16.msra.mxu0 0
    %184 = vmatprep.subr.bf16.mxu0 0
    %185 = vmatpush1.bf16.msra.mxu0 0
    %186 = vmatprep.subr.bf16.mxu0 0
    %187 = vmatpush1.bf16.msra.mxu0 0
    %188 = vmatprep.subr.bf16.mxu0 0
    %189 = vmatpush1.bf16.msra.mxu0 0
    %190 = vmatprep.subr.bf16.mxu0 0
    %191 = vmatpush1.bf16.msra.mxu0 0
    %192 = vmatprep.subr.bf16.mxu0 0
    %193 = vmatpush1.bf16.msra.mxu0 0
    %194 = vmatprep.subr.bf16.mxu0 0
    %195 = vmatpush1.bf16.msra.mxu0 0
    %196 = vmatprep.subr.bf16.mxu0 0
    %197 = vmatpush1.bf16.msra.mxu0 0
    %198 = vmatprep.subr.bf16.mxu0 0
    %199 = vmatpush1.bf16.msra.mxu0 0
    %200 = vmatprep.subr.bf16.mxu0 0
    %201 = vmatpush1.bf16.msra.mxu0 0
    %202 = vmatprep.subr.bf16.mxu0 0
    %203 = vmatpush1.bf16.msra.mxu0 0
    %204 = vmatprep.subr.bf16.mxu0 0
    %205 = vmatpush1.bf16.msra.mxu0 0
    %206 = vmatprep.subr.bf16.mxu0 0
    %207 = vmatpush1.bf16.msra.mxu0 0
    %208 = vmatprep.subr.bf16.mxu0 0
    %209 = vmatpush1.bf16.msra.mxu0 0
    %210 = vmatprep.subr.bf16.mxu0 0
    %211 = vmatpush1.bf16.msra.mxu0 0
    %212 = vmatprep.mubr.bf16.mxu0 0
    %213 = vmatmul.mubr.bf16.gmra.mrb[0].mxu0 %v178
    %v214 = vpop.f32.mrb[0].mxu0
    %v215 = vadd.f32 0.0, %v214
    %v216 = vpop.f32.mrb[0].mxu0
    %v217 = vpop.f32.mrb[0].mxu0
    %v218 = vadd.f32 0.0, %v217
    %v219 = vpop.f32.mrb[0].mxu0
    %220 = vdwg.mxu0
    %v221 = vmul.f32 %v215, %v95
    %v222 = vmul.f32 %v218, %v100
    %v223 = vpack.c.bf16 %v222, %v221
    %224 = vmatprep.subr.bf16.mxu0 0
    %225 = vmatpush1.bf16.msra.mxu0 %v223
    %226 = vmatprep.subr.bf16.mxu0 0
    %227 = vmatpush1.bf16.msra.mxu0 0
    %228 = vmatprep.subr.bf16.mxu0 0
    %229 = vmatpush1.bf16.msra.mxu0 0
    %230 = vmatprep.subr.bf16.mxu0 0
    %231 = vmatpush1.bf16.msra.mxu0 0
    %232 = vmatprep.subr.bf16.mxu0 0
    %233 = vmatpush1.bf16.msra.mxu0 0
    %234 = vmatprep.subr.bf16.mxu0 0
    %235 = vmatpush1.bf16.msra.mxu0 0
    %236 = vmatprep.subr.bf16.mxu0 0
    %237 = vmatpush1.bf16.msra.mxu0 0
    %238 = vmatprep.subr.bf16.mxu0 0
    %239 = vmatpush1.bf16.msra.mxu0 0
    %240 = vmatprep.subr.bf16.mxu0 0
    %241 = vmatpush1.bf16.msra.mxu0 0
    %242 = vmatprep.subr.bf16.mxu0 0
    %243 = vmatpush1.bf16.msra.mxu0 0
    %244 = vmatprep.subr.bf16.mxu0 0
    %245 = vmatpush1.bf16.msra.mxu0 0
    %246 = vmatprep.subr.bf16.mxu0 0
    %247 = vmatpush1.bf16.msra.mxu0 0
    %248 = vmatprep.subr.bf16.mxu0 0
    %249 = vmatpush1.bf16.msra.mxu0 0
    %250 = vmatprep.subr.bf16.mxu0 0
    %251 = vmatpush1.bf16.msra.mxu0 0
    %252 = vmatprep.subr.bf16.mxu0 0
    %253 = vmatpush1.bf16.msra.mxu0 0
    %254 = vmatprep.subr.bf16.mxu0 0
    %255 = vmatpush1.bf16.msra.mxu0 0
    %256 = vmatprep.mubr.bf16.mxu0 0
    %257 = vmatmul.mubr.bf16.gmra.mrb[0].mxu0 %v112
    %v258 = vpop.f32.mrb[0].mxu0
    %v259 = vadd.f32 0.0, %v258
    %v260 = vpop.f32.mrb[0].mxu0
    %v261 = vpop.f32.mrb[0].mxu0
    %v262 = vadd.f32 0.0, %v261
    %v263 = vpop.f32.mrb[0].mxu0
    %264 = vdwg.mxu0
    %v265 = vmul.f32 %v95, %v259
    %v266 = vmul.f32 %v100, %v262
    %v267 = vld [vmem:[%s7] sm:$0x1]
    %v269 = vlaneseq
    %v270 = vshrl.u32 %v269, 7
    %v271 = vsub.s32 0, %v270
    %v272 = vrot.slane %v267, %v271
    %v274 = vadd.f32 %v265, %v272
    %v275 = vadd.f32 %v266, %v272
    %v276 = vlaneseq
    %v277 = vshrl.u32 %v276, 7
    %v278 = vld [vmem:[%s2] sm:$0x1]
    %v279 = vlaneseq
    %v280 = vshrl.u32 %v279, 7
    %v281 = vsub.s32 0, %v280
    %v282 = vrot.slane %v278, %v281
    %vm283 = vcmp.eq.s32.totalorder %v282, %v277
    %v284 = vsel %vm283, 1, 0
    %v285 = vcvt.s32.f32 %v284
    %vm286 = vcmask 123904
    %v287 = vsel %vm286, %v285, 0.0
    %288 = vadd.xlane.f32.xlu0 %v287
    %v289 = vpop.xlane.xlu0 %288
    %v290 = vmax.f32 %v289, 1.0
    %v291 = vrcp.pop %v290
    %v292 = vmul.f32 %v285, %v291
    %v293 = vpack.c.bf16 %v292, %v292
    %v294 = vpack.c.bf16 %v275, %v274
    %v296 = vsel %vm110, %v293, 0
    %298 = vmatprep.subr.bf16.mxu0 0
    %299 = vmatpush1.bf16.msra.mxu0 %v294
    %300 = vmatprep.subr.bf16.mxu0 0
    %301 = vmatpush1.bf16.msra.mxu0 0
    %302 = vmatprep.subr.bf16.mxu0 0
    %303 = vmatpush1.bf16.msra.mxu0 0
    %304 = vmatprep.subr.bf16.mxu0 0
    %305 = vmatpush1.bf16.msra.mxu0 0
    %306 = vmatprep.subr.bf16.mxu0 0
    %307 = vmatpush1.bf16.msra.mxu0 0
    %308 = vmatprep.subr.bf16.mxu0 0
    %309 = vmatpush1.bf16.msra.mxu0 0
    %310 = vmatprep.subr.bf16.mxu0 0
    %311 = vmatpush1.bf16.msra.mxu0 0
    %312 = vmatprep.subr.bf16.mxu0 0
    %313 = vmatpush1.bf16.msra.mxu0 0
    %314 = vmatprep.subr.bf16.mxu0 0
    %315 = vmatpush1.bf16.msra.mxu0 0
    %316 = vmatprep.subr.bf16.mxu0 0
    %317 = vmatpush1.bf16.msra.mxu0 0
    %318 = vmatprep.subr.bf16.mxu0 0
    %319 = vmatpush1.bf16.msra.mxu0 0
    %320 = vmatprep.subr.bf16.mxu0 0
    %321 = vmatpush1.bf16.msra.mxu0 0
    %322 = vmatprep.subr.bf16.mxu0 0
    %323 = vmatpush1.bf16.msra.mxu0 0
    %324 = vmatprep.subr.bf16.mxu0 0
    %325 = vmatpush1.bf16.msra.mxu0 0
    %326 = vmatprep.subr.bf16.mxu0 0
    %327 = vmatpush1.bf16.msra.mxu0 0
    %328 = vmatprep.subr.bf16.mxu0 0
    %329 = vmatpush1.bf16.msra.mxu0 0
    %330 = vmatprep.mubr.bf16.mxu0 0
    %331 = vmatmul.mubr.bf16.gmra.mrb[0].mxu0 %v296
    %v332 = vpop.f32.mrb[0].mxu0
    %v333 = vadd.f32 0.0, %v332
    %v334 = vpop.f32.mrb[0].mxu0
    %v335 = vpop.f32.mrb[0].mxu0
    %v336 = vpop.f32.mrb[0].mxu0
    %337 = vdwg.mxu0
    %vm338 = vcmask 9216
    %v339 = vsel %vm338, %v333, -inf
    %340 = vmax.xlane.f32.xlu0 %v339
    %v341 = vpop.xlane.xlu0 %340
    %v342 = vsub.f32 %v333, %v341
    %v343 = vmul.f32 %v342, 1.442695
    %v344 = vpow.pop %v343
    %v345 = vsel %vm338, %v344, 0.0
    %346 = vadd.xlane.f32.xlu0 %v345
    %v347 = vpop.xlane.xlu0 %346
    %v348 = vlog2.pop %v347
    %v349 = vmul.f32 %v348, 0.6931472
    %v350 = vadd.f32 %v349, %v341
    %v351 = vsub.f32 %v333, %v350
    %352 = vst.msk [vmem:[#allocation2] sm:$0x3] %vm338, %v351
    // Predicated region
    $region34: #{gcn_forward.1} parent=1 // pred_check
      _
    $region35: #{gcn_forward.1} parent=1 // pred_check_branch
      %354 = sbr.rel (0) target = $region37
    $region36: #{gcn_forward.1} parent=1 // pred_region
      %s356 = ssub.s32 32, 32
      %357 = vsyncadd [#allocation3], %s356
      %s359 = sshll.u32 [#allocation2], 4
      %s360 = int_to_ptr.vmem [resolvable:$true] %s359
      %362 = dma.vmem_to_hbm [thread:$0]  %s360, 32, %s8, [#allocation3]
    $region37: #{gcn_forward.1} parent=1 // pred_fallthru
      _
    // Predicated region
    $region38: #{gcn_forward.1} parent=1 // pred_check
      _
    $region39: #{gcn_forward.1} parent=1 // pred_check_branch
      %364 = sbr.rel (0) target = $region41
    $region40: #{gcn_forward.1} parent=1 // pred_region
      %365 = dma.done [#allocation3], 32
    $region41: #{gcn_forward.1} parent=1 // pred_fallthru
      _
    %366 = vsyncpa [#allocation3], 1

</llo_original>
